<compile_context>
chip_gen: v5e
topology: v5e:2x2
jax: 0.10.0
libtpu: 0.0.40
codegen_flags: <defaults>
</compile_context>

<pallas_src>
import jax
import jax.numpy as jnp
from jax.experimental import pallas as pl
from jax.experimental.pallas import tpu as pltpu

TN = 512                         # FC vocab tile width (multiple of 128)
_VMEM_LIMIT = 32 * 1024 * 1024   # within physical VMEM on v5e/v6e/v7x
                                 # TODO(synk): re-derive for non-toy H/L (v7x has 64 MiB)


def _lstm_kernel(tok_ref, embed_ref, w_ih_ref, w_hh_ref, b_ref, h0_ref, c0_ref,
                 x_top_ref, h_out_ref, c_out_ref):
    """Embedding lookup + one LSTM time-step through L stacked layers."""
    L, B, H = h0_ref.shape
    V_e = embed_ref.shape[0]

    # Embedding gather as a one-hot matmul on the MXU: no per-row DMAs and no
    # dynamic VMEM indexing; exact because one-hot rows just select bf16 rows.
    # TODO(synk): for large vocabularies keep the table in HBM and DMA-gather
    #             the B rows instead (one-hot matmul is O(B*V*H)).
    tok = tok_ref[...]                                             # (B, 1) int32
    cols = jax.lax.broadcasted_iota(jnp.int32, (B, V_e), 1)
    onehot = (cols == tok).astype(jnp.bfloat16)                    # (B, V_e)
    x = jnp.dot(onehot, embed_ref[...],
                preferred_element_type=jnp.float32)                # (B, H) f32
    # TODO(synk): dropout (on embedding and between LSTM layers) is identity
    #             (eval mode); training-mode dropout is not implemented.

    for l in range(L):
        xb = x.astype(jnp.bfloat16)
        hb = h0_ref[l].astype(jnp.bfloat16)
        # One fused (B, H) @ (H, 4H) matmul per stream (gate order i|f|g|o):
        # 2 MXU pushes per layer instead of 8, 128-lane-wide outputs.
        gates = (jnp.dot(xb, w_ih_ref[l], preferred_element_type=jnp.float32)
                 + jnp.dot(hb, w_hh_ref[l], preferred_element_type=jnp.float32)
                 + b_ref[l])                                       # (B, 4H) f32
        i_g = jax.nn.sigmoid(gates[:, 0 * H:1 * H])
        f_g = jax.nn.sigmoid(gates[:, 1 * H:2 * H])
        g_g = jnp.tanh(gates[:, 2 * H:3 * H])
        o_g = jax.nn.sigmoid(gates[:, 3 * H:4 * H])
        c_new = f_g * c0_ref[l] + i_g * g_g                        # f32 cell math
        h_new = o_g * jnp.tanh(c_new)
        h_out_ref[l] = h_new
        c_out_ref[l] = c_new
        x = h_new

    x_top_ref[...] = x.astype(jnp.bfloat16)                        # top-layer output


def _fc_kernel(x_ref, w_ref, b_ref, pred_ref):
    """One lane-dense vocab tile of the final projection."""
    pred_ref[...] = (jnp.dot(x_ref[...], w_ref[...],
                             preferred_element_type=jnp.float32)
                     + b_ref[...]).astype(pred_ref.dtype)


def pack_params(embed, w_ih, w_hh, b_ih, b_hh, w_fc, b_fc):
    """Convert PyTorch-layout Decoder weights into the kernel layout."""
    L, fourH, H = w_ih.shape
    V = w_fc.shape[0]
    V_pad = ((V + TN - 1) // TN) * TN
    # PyTorch (L, 4H, in) -> packed (L, in, 4H), gate order i|f|g|o preserved.
    w_ih_p = jnp.transpose(w_ih, (0, 2, 1)).astype(jnp.bfloat16)   # (L, H, 4H)
    w_hh_p = jnp.transpose(w_hh, (0, 2, 1)).astype(jnp.bfloat16)   # (L, H, 4H)
    b_p = (b_ih + b_hh).reshape(L, 1, fourH).astype(jnp.float32)   # (L, 1, 4H)
    w_fc_p = jnp.zeros((H, V_pad), jnp.bfloat16).at[:, :V].set(
        w_fc.T.astype(jnp.bfloat16))
    b_fc_p = jnp.zeros((1, V_pad), jnp.float32).at[:, :V].set(b_fc)
    return embed.astype(jnp.bfloat16), w_ih_p, w_hh_p, b_p, w_fc_p, b_fc_p, V


def decoder_forward(tokens, hidden, cell, packed):
    """tokens: (B,) int32 ; hidden/cell: (L, B, H) f32. Returns (pred, h, c)."""
    embed, w_ih_p, w_hh_p, b_p, w_fc_p, b_fc_p, V = packed
    L, B, H = hidden.shape
    V_e = embed.shape[0]
    V_pad = w_fc_p.shape[1]
    n_tiles = V_pad // TN
    tok2d = tokens.astype(jnp.int32).reshape(B, 1)

    def full(shape):
        n = len(shape)
        return pl.BlockSpec(shape, lambda *_, n=n: (0,) * n)

    # ---- call #1: embedding + single LSTM step (tiny, runs once) ----------
    lstm_grid = pltpu.PrefetchScalarGridSpec(
        num_scalar_prefetch=0,
        grid=(1,),
        in_specs=[full((B, 1)),                 # token ids
                  full((V_e, H)),               # embedding table (bf16, VMEM)
                  full((L, H, 4 * H)),          # packed W_ih
                  full((L, H, 4 * H)),          # packed W_hh
                  full((L, 1, 4 * H)),          # fused bias
                  full((L, B, H)),              # hidden
                  full((L, B, H))],             # cell
        out_specs=(full((B, H)), full((L, B, H)), full((L, B, H))),
    )
    lstm_cost = pl.CostEstimate(
        flops=2 * B * V_e * H + L * 16 * B * H * H,
        transcendentals=5 * L * B * H,
        bytes_accessed=(embed.size + w_ih_p.size + w_hh_p.size) * 2
        + (b_p.size + 5 * L * B * H) * 4)
    x_top, h_out, c_out = pl.pallas_call(
        _lstm_kernel,
        grid_spec=lstm_grid,
        out_shape=(jax.ShapeDtypeStruct((B, H), jnp.bfloat16),
                   jax.ShapeDtypeStruct((L, B, H), jnp.float32),
                   jax.ShapeDtypeStruct((L, B, H), jnp.float32)),
        compiler_params=pltpu.CompilerParams(
            dimension_semantics=("arbitrary",),
            vmem_limit_bytes=_VMEM_LIMIT),
        input_output_aliases={5: 1, 6: 2},      # hidden -> h_out, cell -> c_out
        cost_estimate=lstm_cost,
    )(tok2d, embed, w_ih_p, w_hh_p, b_p, hidden, cell)

    # ---- call #2: FC over wide vocab tiles; "parallel" => megacore shards --
    fc_grid = pltpu.PrefetchScalarGridSpec(
        num_scalar_prefetch=0,
        grid=(n_tiles,),
        in_specs=[pl.BlockSpec((B, H), lambda j: (0, 0)),     # x_top (constant)
                  pl.BlockSpec((H, TN), lambda j: (0, j)),    # w_fc vocab tile
                  pl.BlockSpec((1, TN), lambda j: (0, j))],   # b_fc vocab tile
        out_specs=pl.BlockSpec((B, TN), lambda j: (0, j)),    # pred vocab tile
    )
    fc_cost = pl.CostEstimate(
        flops=2 * B * H * V_pad,
        transcendentals=0,
        bytes_accessed=w_fc_p.size * 2 + b_fc_p.size * 4
        + B * H * 2 + B * V_pad * 2)
    pred_pad = pl.pallas_call(
        _fc_kernel,
        grid_spec=fc_grid,
        out_shape=jax.ShapeDtypeStruct((B, V_pad), jnp.bfloat16),
        compiler_params=pltpu.CompilerParams(
            dimension_semantics=("parallel",),
            vmem_limit_bytes=_VMEM_LIMIT),
        cost_estimate=fc_cost,
    )(x_top, w_fc_p, b_fc_p)

    return pred_pad[:, :V].astype(jnp.float32), h_out, c_out


def _reference(tokens, hidden, cell, embed, w_ih, w_hh, b_ih, b_hh, w_fc, b_fc):
    """Pure-JAX f32 replica of the PyTorch Decoder forward (eval mode)."""
    L, fourH, H = w_ih.shape
    x = embed[tokens]                                              # (B, H)
    hs, cs = [], []
    for l in range(L):
        g = x @ w_ih[l].T + hidden[l] @ w_hh[l].T + b_ih[l] + b_hh[l]
        i_g = jax.nn.sigmoid(g[:, 0:H])
        f_g = jax.nn.sigmoid(g[:, H:2 * H])
        g_g = jnp.tanh(g[:, 2 * H:3 * H])
        o_g = jax.nn.sigmoid(g[:, 3 * H:4 * H])
        c_new = f_g * cell[l] + i_g * g_g
        h_new = o_g * jnp.tanh(c_new)
        hs.append(h_new)
        cs.append(c_new)
        x = h_new
    pred = x @ w_fc.T + b_fc
    return pred, jnp.stack(hs), jnp.stack(cs)


if __name__ == "__main__":
    # Small shapes consistent with the module: vocab V=1000 (two 512-wide FC
    # tiles -> exercises the vocab grid), embedding_dim == hidden_dim H=32,
    # n_layers L=2, batch B=8, dropout = 0 (eval / identity).
    V, H, L, B = 1000, 32, 2, 8

    key = jax.random.PRNGKey(0)
    ks = jax.random.split(key, 10)

    embed = jax.random.normal(ks[0], (V, H), jnp.float32) * 0.1
    # PyTorch layout: W_ih (4H, in), W_hh (4H, H), gate order i, f, g, o.
    w_ih = jax.random.normal(ks[1], (L, 4 * H, H), jnp.float32) * 0.1
    w_hh = jax.random.normal(ks[2], (L, 4 * H, H), jnp.float32) * 0.1
    b_ih = jax.random.normal(ks[3], (L, 4 * H), jnp.float32) * 0.1
    b_hh = jax.random.normal(ks[4], (L, 4 * H), jnp.float32) * 0.1
    w_fc = jax.random.normal(ks[5], (V, H), jnp.float32) * 0.1
    b_fc = jax.random.normal(ks[6], (V,), jnp.float32) * 0.1

    tokens = jax.random.randint(ks[7], (B,), 0, V, jnp.int32)
    hidden = jax.random.normal(ks[8], (L, B, H), jnp.float32) * 0.1
    cell = jax.random.normal(ks[9], (L, B, H), jnp.float32) * 0.1

    # f32 PyTorch-semantics reference, computed BEFORE the kernel so the
    # aliased h/c outputs can never interfere with it.
    pred_r, h_r, c_r = _reference(tokens, hidden, cell, embed, w_ih, w_hh,
                                  b_ih, b_hh, w_fc, b_fc)

    packed = pack_params(embed, w_ih, w_hh, b_ih, b_hh, w_fc, b_fc)
    pred, h_out, c_out = jax.block_until_ready(
        decoder_forward(tokens, hidden, cell, packed))

    assert pred.shape == (B, V)
    assert h_out.shape == (L, B, H) and c_out.shape == (L, B, H)
    # Tolerances cover bf16 weight storage + bf16 pred writeback vs f32 torch math.
    assert jnp.allclose(pred, pred_r, atol=3e-2), "prediction mismatch"
    assert jnp.allclose(h_out, h_r, atol=1e-2), "hidden mismatch"
    assert jnp.allclose(c_out, c_r, atol=1e-2), "cell mismatch"

    print("KERNEL_OK")
</pallas_src>

<mosaic_0001>
module attributes {stable_mosaic.version = 11 : i64} {
  func.func @_lstm_kernel(%arg0: i32, %arg1: memref<8x1xi32, #tpu.memory_space<vmem>>, %arg2: memref<1000x32xbf16, #tpu.memory_space<vmem>>, %arg3: memref<2x32x128xbf16, #tpu.memory_space<vmem>>, %arg4: memref<2x32x128xbf16, #tpu.memory_space<vmem>>, %arg5: memref<2x1x128xf32, #tpu.memory_space<vmem>>, %arg6: memref<2x8x32xf32, #tpu.memory_space<vmem>>, %arg7: memref<2x8x32xf32, #tpu.memory_space<vmem>>, %arg8: memref<8x32xbf16, #tpu.memory_space<vmem>>, %arg9: memref<2x8x32xf32, #tpu.memory_space<vmem>>, %arg10: memref<2x8x32xf32, #tpu.memory_space<vmem>>) attributes {dimension_semantics = [#tpu.dimension_semantics<arbitrary>], iteration_bounds = array<i64: 1>, scalar_prefetch = 0 : i64, scratch_operands = 0 : i64, tpu.core_type = #tpu.core_type<tc>, window_params = [{pipeline_mode = #tpu.pipeline_mode<synchronous>, transform_indices = @transform_0, window_bounds = array<i64: 8, 1>}, {pipeline_mode = #tpu.pipeline_mode<synchronous>, transform_indices = @transform_1, window_bounds = array<i64: 1000, 32>}, {pipeline_mode = #tpu.pipeline_mode<synchronous>, transform_indices = @transform_2, window_bounds = array<i64: 2, 32, 128>}, {pipeline_mode = #tpu.pipeline_mode<synchronous>, transform_indices = @transform_3, window_bounds = array<i64: 2, 32, 128>}, {pipeline_mode = #tpu.pipeline_mode<synchronous>, transform_indices = @transform_4, window_bounds = array<i64: 2, 1, 128>}, {pipeline_mode = #tpu.pipeline_mode<synchronous>, transform_indices = @transform_5, window_bounds = array<i64: 2, 8, 32>}, {pipeline_mode = #tpu.pipeline_mode<synchronous>, transform_indices = @transform_6, window_bounds = array<i64: 2, 8, 32>}, {pipeline_mode = #tpu.pipeline_mode<synchronous>, transform_indices = @transform_7, window_bounds = array<i64: 8, 32>}, {pipeline_mode = #tpu.pipeline_mode<synchronous>, transform_indices = @transform_8, window_bounds = array<i64: 2, 8, 32>}, {pipeline_mode = #tpu.pipeline_mode<synchronous>, transform_indices = @transform_9, window_bounds = array<i64: 2, 8, 32>}]} {
    %c0 = arith.constant 0 : index
    %c0_0 = arith.constant 0 : index
    %0 = vector.load %arg1[%c0, %c0_0] : memref<8x1xi32, #tpu.memory_space<vmem>>, vector<8x1xi32>
    %1 = tpu.iota {dimensions = array<i32: 1>} : vector<8x1000xi32>
    %2 = vector.broadcast %0 : vector<8x1xi32> to vector<8x1000xi32>
    %3 = arith.cmpi eq, %1, %2 : vector<8x1000xi32>
    %4 = arith.extui %3 : vector<8x1000xi1> to vector<8x1000xi32>
    %5 = arith.sitofp %4 : vector<8x1000xi32> to vector<8x1000xf32>
    %6 = arith.truncf %5 : vector<8x1000xf32> to vector<8x1000xbf16>
    %c0_1 = arith.constant 0 : index
    %c0_2 = arith.constant 0 : index
    %7 = vector.load %arg2[%c0_1, %c0_2] : memref<1000x32xbf16, #tpu.memory_space<vmem>>, vector<1000x32xbf16>
    %cst = arith.constant dense<0.000000e+00> : vector<8x32xf32>
    %8 = tpu.matmul %6, %7, %cst {dimension_numbers = #tpu.dot_dimension_numbers<[1], [0], [0], [1], [0, 0, 1, 1], [], []>} : vector<8x1000xbf16>, vector<1000x32xbf16>, vector<8x32xf32> -> vector<8x32xf32>
    %9 = arith.truncf %8 : vector<8x32xf32> to vector<8x32xbf16>
    %c0_3 = arith.constant 0 : index
    %c0_4 = arith.constant 0 : index
    %c0_5 = arith.constant 0 : index
    %10 = vector.load %arg6[%c0_3, %c0_4, %c0_5] : memref<2x8x32xf32, #tpu.memory_space<vmem>>, vector<1x8x32xf32>
    %11 = vector.shape_cast %10 : vector<1x8x32xf32> to vector<8x32xf32>
    %12 = arith.truncf %11 : vector<8x32xf32> to vector<8x32xbf16>
    %c0_6 = arith.constant 0 : index
    %c0_7 = arith.constant 0 : index
    %c0_8 = arith.constant 0 : index
    %13 = vector.load %arg3[%c0_6, %c0_7, %c0_8] : memref<2x32x128xbf16, #tpu.memory_space<vmem>>, vector<1x32x128xbf16>
    %14 = vector.shape_cast %13 : vector<1x32x128xbf16> to vector<32x128xbf16>
    %cst_9 = arith.constant dense<0.000000e+00> : vector<8x128xf32>
    %15 = tpu.matmul %9, %14, %cst_9 {dimension_numbers = #tpu.dot_dimension_numbers<[1], [0], [0], [1], [0, 0, 1, 1], [], []>} : vector<8x32xbf16>, vector<32x128xbf16>, vector<8x128xf32> -> vector<8x128xf32>
    %c0_10 = arith.constant 0 : index
    %c0_11 = arith.constant 0 : index
    %c0_12 = arith.constant 0 : index
    %16 = vector.load %arg4[%c0_10, %c0_11, %c0_12] : memref<2x32x128xbf16, #tpu.memory_space<vmem>>, vector<1x32x128xbf16>
    %17 = vector.shape_cast %16 : vector<1x32x128xbf16> to vector<32x128xbf16>
    %cst_13 = arith.constant dense<0.000000e+00> : vector<8x128xf32>
    %18 = tpu.matmul %12, %17, %cst_13 {dimension_numbers = #tpu.dot_dimension_numbers<[1], [0], [0], [1], [0, 0, 1, 1], [], []>} : vector<8x32xbf16>, vector<32x128xbf16>, vector<8x128xf32> -> vector<8x128xf32>
    %19 = arith.addf %15, %18 : vector<8x128xf32>
    %c0_14 = arith.constant 0 : index
    %c0_15 = arith.constant 0 : index
    %c0_16 = arith.constant 0 : index
    %20 = vector.load %arg5[%c0_14, %c0_15, %c0_16] : memref<2x1x128xf32, #tpu.memory_space<vmem>>, vector<1x1x128xf32>
    %21 = vector.shape_cast %20 : vector<1x1x128xf32> to vector<1x128xf32>
    %22 = vector.broadcast %21 : vector<1x128xf32> to vector<8x128xf32>
    %23 = arith.addf %19, %22 : vector<8x128xf32>
    %24 = vector.extract_strided_slice %23 {offsets = [0, 0], sizes = [8, 32], strides = [1, 1]} : vector<8x128xf32> to vector<8x32xf32>
    %25 = arith.negf %24 : vector<8x32xf32>
    %26 = math.exp %25 : vector<8x32xf32>
    %cst_17 = arith.constant 1.000000e+00 : f32
    %27 = vector.broadcast %cst_17 : f32 to vector<8x32xf32>
    %28 = arith.addf %27, %26 : vector<8x32xf32>
    %29 = arith.divf %27, %28 : vector<8x32xf32>
    %30 = vector.extract_strided_slice %23 {offsets = [0, 32], sizes = [8, 32], strides = [1, 1]} : vector<8x128xf32> to vector<8x32xf32>
    %31 = arith.negf %30 : vector<8x32xf32>
    %32 = math.exp %31 : vector<8x32xf32>
    %cst_18 = arith.constant 1.000000e+00 : f32
    %33 = vector.broadcast %cst_18 : f32 to vector<8x32xf32>
    %34 = arith.addf %33, %32 : vector<8x32xf32>
    %35 = arith.divf %33, %34 : vector<8x32xf32>
    %36 = vector.extract_strided_slice %23 {offsets = [0, 64], sizes = [8, 32], strides = [1, 1]} : vector<8x128xf32> to vector<8x32xf32>
    %37 = math.tanh %36 : vector<8x32xf32>
    %38 = vector.extract_strided_slice %23 {offsets = [0, 96], sizes = [8, 32], strides = [1, 1]} : vector<8x128xf32> to vector<8x32xf32>
    %39 = arith.negf %38 : vector<8x32xf32>
    %40 = math.exp %39 : vector<8x32xf32>
    %cst_19 = arith.constant 1.000000e+00 : f32
    %41 = vector.broadcast %cst_19 : f32 to vector<8x32xf32>
    %42 = arith.addf %41, %40 : vector<8x32xf32>
    %43 = arith.divf %41, %42 : vector<8x32xf32>
    %c0_20 = arith.constant 0 : index
    %c0_21 = arith.constant 0 : index
    %c0_22 = arith.constant 0 : index
    %44 = vector.load %arg7[%c0_20, %c0_21, %c0_22] : memref<2x8x32xf32, #tpu.memory_space<vmem>>, vector<1x8x32xf32>
    %45 = vector.shape_cast %44 : vector<1x8x32xf32> to vector<8x32xf32>
    %46 = arith.mulf %35, %45 : vector<8x32xf32>
    %47 = arith.mulf %29, %37 : vector<8x32xf32>
    %48 = arith.addf %46, %47 : vector<8x32xf32>
    %49 = math.tanh %48 : vector<8x32xf32>
    %50 = arith.mulf %43, %49 : vector<8x32xf32>
    %c0_23 = arith.constant 0 : index
    %c0_24 = arith.constant 0 : index
    %c0_25 = arith.constant 0 : index
    %51 = vector.load %arg9[%c0_23, %c0_24, %c0_25] : memref<2x8x32xf32, #tpu.memory_space<vmem>>, vector<1x8x32xf32>
    %52 = vector.shape_cast %51 : vector<1x8x32xf32> to vector<8x32xf32>
    %53 = vector.shape_cast %50 : vector<8x32xf32> to vector<1x8x32xf32>
    tpu.vector_store %arg9[%c0_23, %c0_24, %c0_25], %53 {strides = array<i32>} : memref<2x8x32xf32, #tpu.memory_space<vmem>>, vector<1x8x32xf32>,
    %c0_26 = arith.constant 0 : index
    %c0_27 = arith.constant 0 : index
    %c0_28 = arith.constant 0 : index
    %54 = vector.load %arg10[%c0_26, %c0_27, %c0_28] : memref<2x8x32xf32, #tpu.memory_space<vmem>>, vector<1x8x32xf32>
    %55 = vector.shape_cast %54 : vector<1x8x32xf32> to vector<8x32xf32>
    %56 = vector.shape_cast %48 : vector<8x32xf32> to vector<1x8x32xf32>
    tpu.vector_store %arg10[%c0_26, %c0_27, %c0_28], %56 {strides = array<i32>} : memref<2x8x32xf32, #tpu.memory_space<vmem>>, vector<1x8x32xf32>,
    %57 = arith.truncf %50 : vector<8x32xf32> to vector<8x32xbf16>
    %c1 = arith.constant 1 : index
    %c0_29 = arith.constant 0 : index
    %c0_30 = arith.constant 0 : index
    %58 = vector.load %arg6[%c1, %c0_29, %c0_30] : memref<2x8x32xf32, #tpu.memory_space<vmem>>, vector<1x8x32xf32>
    %59 = vector.shape_cast %58 : vector<1x8x32xf32> to vector<8x32xf32>
    %60 = arith.truncf %59 : vector<8x32xf32> to vector<8x32xbf16>
    %c1_31 = arith.constant 1 : index
    %c0_32 = arith.constant 0 : index
    %c0_33 = arith.constant 0 : index
    %61 = vector.load %arg3[%c1_31, %c0_32, %c0_33] : memref<2x32x128xbf16, #tpu.memory_space<vmem>>, vector<1x32x128xbf16>
    %62 = vector.shape_cast %61 : vector<1x32x128xbf16> to vector<32x128xbf16>
    %cst_34 = arith.constant dense<0.000000e+00> : vector<8x128xf32>
    %63 = tpu.matmul %57, %62, %cst_34 {dimension_numbers = #tpu.dot_dimension_numbers<[1], [0], [0], [1], [0, 0, 1, 1], [], []>} : vector<8x32xbf16>, vector<32x128xbf16>, vector<8x128xf32> -> vector<8x128xf32>
    %c1_35 = arith.constant 1 : index
    %c0_36 = arith.constant 0 : index
    %c0_37 = arith.constant 0 : index
    %64 = vector.load %arg4[%c1_35, %c0_36, %c0_37] : memref<2x32x128xbf16, #tpu.memory_space<vmem>>, vector<1x32x128xbf16>
    %65 = vector.shape_cast %64 : vector<1x32x128xbf16> to vector<32x128xbf16>
    %cst_38 = arith.constant dense<0.000000e+00> : vector<8x128xf32>
    %66 = tpu.matmul %60, %65, %cst_38 {dimension_numbers = #tpu.dot_dimension_numbers<[1], [0], [0], [1], [0, 0, 1, 1], [], []>} : vector<8x32xbf16>, vector<32x128xbf16>, vector<8x128xf32> -> vector<8x128xf32>
    %67 = arith.addf %63, %66 : vector<8x128xf32>
    %c1_39 = arith.constant 1 : index
    %c0_40 = arith.constant 0 : index
    %c0_41 = arith.constant 0 : index
    %68 = vector.load %arg5[%c1_39, %c0_40, %c0_41] : memref<2x1x128xf32, #tpu.memory_space<vmem>>, vector<1x1x128xf32>
    %69 = vector.shape_cast %68 : vector<1x1x128xf32> to vector<1x128xf32>
    %70 = vector.broadcast %69 : vector<1x128xf32> to vector<8x128xf32>
    %71 = arith.addf %67, %70 : vector<8x128xf32>
    %72 = vector.extract_strided_slice %71 {offsets = [0, 0], sizes = [8, 32], strides = [1, 1]} : vector<8x128xf32> to vector<8x32xf32>
    %73 = arith.negf %72 : vector<8x32xf32>
    %74 = math.exp %73 : vector<8x32xf32>
    %cst_42 = arith.constant 1.000000e+00 : f32
    %75 = vector.broadcast %cst_42 : f32 to vector<8x32xf32>
    %76 = arith.addf %75, %74 : vector<8x32xf32>
    %77 = arith.divf %75, %76 : vector<8x32xf32>
    %78 = vector.extract_strided_slice %71 {offsets = [0, 32], sizes = [8, 32], strides = [1, 1]} : vector<8x128xf32> to vector<8x32xf32>
    %79 = arith.negf %78 : vector<8x32xf32>
    %80 = math.exp %79 : vector<8x32xf32>
    %cst_43 = arith.constant 1.000000e+00 : f32
    %81 = vector.broadcast %cst_43 : f32 to vector<8x32xf32>
    %82 = arith.addf %81, %80 : vector<8x32xf32>
    %83 = arith.divf %81, %82 : vector<8x32xf32>
    %84 = vector.extract_strided_slice %71 {offsets = [0, 64], sizes = [8, 32], strides = [1, 1]} : vector<8x128xf32> to vector<8x32xf32>
    %85 = math.tanh %84 : vector<8x32xf32>
    %86 = vector.extract_strided_slice %71 {offsets = [0, 96], sizes = [8, 32], strides = [1, 1]} : vector<8x128xf32> to vector<8x32xf32>
    %87 = arith.negf %86 : vector<8x32xf32>
    %88 = math.exp %87 : vector<8x32xf32>
    %cst_44 = arith.constant 1.000000e+00 : f32
    %89 = vector.broadcast %cst_44 : f32 to vector<8x32xf32>
    %90 = arith.addf %89, %88 : vector<8x32xf32>
    %91 = arith.divf %89, %90 : vector<8x32xf32>
    %c1_45 = arith.constant 1 : index
    %c0_46 = arith.constant 0 : index
    %c0_47 = arith.constant 0 : index
    %92 = vector.load %arg7[%c1_45, %c0_46, %c0_47] : memref<2x8x32xf32, #tpu.memory_space<vmem>>, vector<1x8x32xf32>
    %93 = vector.shape_cast %92 : vector<1x8x32xf32> to vector<8x32xf32>
    %94 = arith.mulf %83, %93 : vector<8x32xf32>
    %95 = arith.mulf %77, %85 : vector<8x32xf32>
    %96 = arith.addf %94, %95 : vector<8x32xf32>
    %97 = math.tanh %96 : vector<8x32xf32>
    %98 = arith.mulf %91, %97 : vector<8x32xf32>
    %c1_48 = arith.constant 1 : index
    %c0_49 = arith.constant 0 : index
    %c0_50 = arith.constant 0 : index
    %99 = vector.load %arg9[%c1_48, %c0_49, %c0_50] : memref<2x8x32xf32, #tpu.memory_space<vmem>>, vector<1x8x32xf32>
    %100 = vector.shape_cast %99 : vector<1x8x32xf32> to vector<8x32xf32>
    %101 = vector.shape_cast %98 : vector<8x32xf32> to vector<1x8x32xf32>
    tpu.vector_store %arg9[%c1_48, %c0_49, %c0_50], %101 {strides = array<i32>} : memref<2x8x32xf32, #tpu.memory_space<vmem>>, vector<1x8x32xf32>,
    %c1_51 = arith.constant 1 : index
    %c0_52 = arith.constant 0 : index
    %c0_53 = arith.constant 0 : index
    %102 = vector.load %arg10[%c1_51, %c0_52, %c0_53] : memref<2x8x32xf32, #tpu.memory_space<vmem>>, vector<1x8x32xf32>
    %103 = vector.shape_cast %102 : vector<1x8x32xf32> to vector<8x32xf32>
    %104 = vector.shape_cast %96 : vector<8x32xf32> to vector<1x8x32xf32>
    tpu.vector_store %arg10[%c1_51, %c0_52, %c0_53], %104 {strides = array<i32>} : memref<2x8x32xf32, #tpu.memory_space<vmem>>, vector<1x8x32xf32>,
    %105 = arith.truncf %98 : vector<8x32xf32> to vector<8x32xbf16>
    %c0_54 = arith.constant 0 : index
    %c0_55 = arith.constant 0 : index
    %106 = vector.load %arg8[%c0_54, %c0_55] : memref<8x32xbf16, #tpu.memory_space<vmem>>, vector<8x32xbf16>
    tpu.vector_store %arg8[%c0_54, %c0_55], %105 {strides = array<i32>} : memref<8x32xbf16, #tpu.memory_space<vmem>>, vector<8x32xbf16>,
    return
  }
  func.func @transform_0(%arg0: i32) -> (i32, i32) {
    %c0_i32 = arith.constant 0 : i32
    %c0_i32_0 = arith.constant 0 : i32
    %c0_i32_1 = arith.constant 0 : i32
    return %c0_i32, %c0_i32_0 : i32, i32
  }
  func.func @transform_1(%arg0: i32) -> (i32, i32) {
    %c0_i32 = arith.constant 0 : i32
    %c0_i32_0 = arith.constant 0 : i32
    %c0_i32_1 = arith.constant 0 : i32
    return %c0_i32, %c0_i32_0 : i32, i32
  }
  func.func @transform_2(%arg0: i32) -> (i32, i32, i32) {
    %c0_i32 = arith.constant 0 : i32
    %c0_i32_0 = arith.constant 0 : i32
    %c0_i32_1 = arith.constant 0 : i32
    %c0_i32_2 = arith.constant 0 : i32
    return %c0_i32, %c0_i32_0, %c0_i32_1 : i32, i32, i32
  }
  func.func @transform_3(%arg0: i32) -> (i32, i32, i32) {
    %c0_i32 = arith.constant 0 : i32
    %c0_i32_0 = arith.constant 0 : i32
    %c0_i32_1 = arith.constant 0 : i32
    %c0_i32_2 = arith.constant 0 : i32
    return %c0_i32, %c0_i32_0, %c0_i32_1 : i32, i32, i32
  }
  func.func @transform_4(%arg0: i32) -> (i32, i32, i32) {
    %c0_i32 = arith.constant 0 : i32
    %c0_i32_0 = arith.constant 0 : i32
    %c0_i32_1 = arith.constant 0 : i32
    %c0_i32_2 = arith.constant 0 : i32
    return %c0_i32, %c0_i32_0, %c0_i32_1 : i32, i32, i32
  }
  func.func @transform_5(%arg0: i32) -> (i32, i32, i32) {
    %c0_i32 = arith.constant 0 : i32
    %c0_i32_0 = arith.constant 0 : i32
    %c0_i32_1 = arith.constant 0 : i32
    %c0_i32_2 = arith.constant 0 : i32
    return %c0_i32, %c0_i32_0, %c0_i32_1 : i32, i32, i32
  }
  func.func @transform_6(%arg0: i32) -> (i32, i32, i32) {
    %c0_i32 = arith.constant 0 : i32
    %c0_i32_0 = arith.constant 0 : i32
    %c0_i32_1 = arith.constant 0 : i32
    %c0_i32_2 = arith.constant 0 : i32
    return %c0_i32, %c0_i32_0, %c0_i32_1 : i32, i32, i32
  }
  func.func @transform_7(%arg0: i32) -> (i32, i32) {
    %c0_i32 = arith.constant 0 : i32
    %c0_i32_0 = arith.constant 0 : i32
    %c0_i32_1 = arith.constant 0 : i32
    return %c0_i32, %c0_i32_0 : i32, i32
  }
  func.func @transform_8(%arg0: i32) -> (i32, i32, i32) {
    %c0_i32 = arith.constant 0 : i32
    %c0_i32_0 = arith.constant 0 : i32
    %c0_i32_1 = arith.constant 0 : i32
    %c0_i32_2 = arith.constant 0 : i32
    return %c0_i32, %c0_i32_0, %c0_i32_1 : i32, i32, i32
  }
  func.func @transform_9(%arg0: i32) -> (i32, i32, i32) {
    %c0_i32 = arith.constant 0 : i32
    %c0_i32_0 = arith.constant 0 : i32
    %c0_i32_1 = arith.constant 0 : i32
    %c0_i32_2 = arith.constant 0 : i32
    return %c0_i32, %c0_i32_0, %c0_i32_1 : i32, i32, i32
  }
}

</mosaic_0001>

<llo_original>
// kernel: tpu_custom_call.1
$region0: #{tpu_custom_call.1}
  #allocation0 [shape = 'u32[]', space=smem, size = 0x4, offset = 0x4, fixed_abs, tag = 'smem constant byte address 0x4 - core index']
  #allocation1 [shape = 'u32[72,128]{1,0:T(1,128)}', space=vmem, size = 0x9000, scoped, tag = 'internal scratch']
  %s0 = inlined_call_operand.vmem [shape: s32[8,1], index: 0, kind: input, shape index: {}]
  %s1 = inlined_call_operand.vmem [shape: bf16[1000,32], index: 1, kind: input, shape index: {}]
  %s2 = inlined_call_operand.vmem [shape: bf16[2,32,128], index: 2, kind: input, shape index: {}]
  %s3 = inlined_call_operand.vmem [shape: bf16[2,32,128], index: 3, kind: input, shape index: {}]
  %s4 = inlined_call_operand.vmem [shape: f32[2,1,128], index: 4, kind: input, shape index: {}]
  %s5 = inlined_call_operand.hbm [shape: f32[2,8,32], index: 5, kind: input, shape index: {}, may-alias: {5,8}]
  %s6 = inlined_call_operand.hbm [shape: f32[2,8,32], index: 6, kind: input, shape index: {}, may-alias: {6,9}]
  %s7 = inlined_call_operand.hbm [shape: bf16[8,32], index: 7, kind: output, shape index: {0}]
  %s8 = inlined_call_operand.hbm [shape: f32[2,8,32], index: 8, kind: output, shape index: {1}, may-alias: {5,8}]
  %s9 = inlined_call_operand.hbm [shape: f32[2,8,32], index: 9, kind: output, shape index: {2}, may-alias: {6,9}]
  %10 = xla_tuple %s7, %s8, %s9
  %s11 = sld [smem:[#allocation0]]
  $region62: #{tpu_custom_call.1} parent=0
    _
  %s13 = ssub.s32 1, %s11
  %s14 = scalar_select 0, %s13, %s11
  $region1: #{tpu_custom_call.1} parent=0
    #allocation2 [shape = 'u8[8192]{0}', space=vmem, size = 0x2000, scoped, tag = 'input window, operand 5, single buffered']
    #allocation3 [shape = 's32[1]{0}', space=sflag, size = 0x4, scoped, tag = 'scoped memory for tpu_custom_call.1']
    #allocation4 [shape = 's32[1]{0}', space=sflag, size = 0x4, scoped, tag = 'scoped memory for tpu_custom_call.1']
    #allocation5 [shape = 'u8[8192]{0}', space=vmem, size = 0x2000, scoped, tag = 'input window, operand 6, single buffered']
    #allocation6 [shape = 's32[1]{0}', space=sflag, size = 0x4, scoped, tag = 'scoped memory for tpu_custom_call.1']
    #allocation7 [shape = 'u8[2048]{0}', space=vmem, size = 0x800, scoped, tag = 'output window, operand 0, single buffered']
    #allocation8 [shape = 'u8[8192]{0}', space=vmem, size = 0x2000, scoped, tag = 'output window, operand 1, single buffered']
    #allocation9 [shape = 's32[1]{0}', space=sflag, size = 0x4, scoped, tag = 'scoped memory for tpu_custom_call.1']
    #allocation10 [shape = 'u8[8192]{0}', space=vmem, size = 0x2000, scoped, tag = 'output window, operand 2, single buffered']
    %15 = vsyncpa [#allocation3], 0
    %16 = vsyncpa [#allocation6], 0
    %17 = vsyncpa [#allocation4], 0
    %18 = vsyncpa [#allocation9], 0
    // Predicated region
    $region2: #{tpu_custom_call.1} parent=1 // pred_check
      _
    $region3: #{tpu_custom_call.1} parent=1 // pred_check_branch
      %20 = sbr.rel (0) target = $region5
    $region4: #{tpu_custom_call.1} parent=1 // pred_region
      _
    $region5: #{tpu_custom_call.1} parent=1 // pred_fallthru
      _
    // Predicated region
    $region6: #{tpu_custom_call.1} parent=1 // pred_check
      _
    $region7: #{tpu_custom_call.1} parent=1 // pred_check_branch
      %22 = sbr.rel (0) target = $region9
    $region8: #{tpu_custom_call.1} parent=1 // pred_region
      _
    $region9: #{tpu_custom_call.1} parent=1 // pred_fallthru
      _
    // Predicated region
    $region10: #{tpu_custom_call.1} parent=1 // pred_check
      _
    $region11: #{tpu_custom_call.1} parent=1 // pred_check_branch
      %24 = sbr.rel (0) target = $region13
    $region12: #{tpu_custom_call.1} parent=1 // pred_region
      _
    $region13: #{tpu_custom_call.1} parent=1 // pred_fallthru
      _
    // Predicated region
    $region14: #{tpu_custom_call.1} parent=1 // pred_check
      _
    $region15: #{tpu_custom_call.1} parent=1 // pred_check_branch
      %26 = sbr.rel (0) target = $region17
    $region16: #{tpu_custom_call.1} parent=1 // pred_region
      _
    $region17: #{tpu_custom_call.1} parent=1 // pred_fallthru
      _
    // Predicated region
    $region18: #{tpu_custom_call.1} parent=1 // pred_check
      _
    $region19: #{tpu_custom_call.1} parent=1 // pred_check_branch
      %28 = sbr.rel (0) target = $region21
    $region20: #{tpu_custom_call.1} parent=1 // pred_region
      _
    $region21: #{tpu_custom_call.1} parent=1 // pred_fallthru
      _
    // Predicated region
    $region22: #{tpu_custom_call.1} parent=1 // pred_check
      _
    $region23: #{tpu_custom_call.1} parent=1 // pred_check_branch
      %30 = sbr.rel (0) target = $region25
    $region24: #{tpu_custom_call.1} parent=1 // pred_region
      %32 = vsyncadd [#allocation3], 0
      %s33 = sshll.u32 %s5, 4
      %s34 = int_to_ptr.hbm [resolvable:$true] %s33
      %s35 = sshll.u32 [#allocation2], 4
      %s36 = int_to_ptr.vmem [resolvable:$true] %s35
      %41 = dma.hbm_to_vmem [thread:$0]  %s34, 256, %s36, [#allocation3], 128, 128, 8
    $region25: #{tpu_custom_call.1} parent=1 // pred_fallthru
      _
    // Predicated region
    $region26: #{tpu_custom_call.1} parent=1 // pred_check
      _
    $region27: #{tpu_custom_call.1} parent=1 // pred_check_branch
      %43 = sbr.rel (0) target = $region29
    $region28: #{tpu_custom_call.1} parent=1 // pred_region
      %45 = vsyncadd [#allocation6], 0
      %s46 = sshll.u32 %s6, 4
      %s47 = int_to_ptr.hbm [resolvable:$true] %s46
      %s48 = sshll.u32 [#allocation5], 4
      %s49 = int_to_ptr.vmem [resolvable:$true] %s48
      %54 = dma.hbm_to_vmem [thread:$0]  %s47, 256, %s49, [#allocation6], 128, 128, 8
    $region29: #{tpu_custom_call.1} parent=1 // pred_fallthru
      _
    // Predicated region
    $region30: #{tpu_custom_call.1} parent=1 // pred_check
      _
    $region31: #{tpu_custom_call.1} parent=1 // pred_check_branch
      %56 = sbr.rel (0) target = $region33
    $region32: #{tpu_custom_call.1} parent=1 // pred_region
      %58 = dma.done [#allocation3], 256
    $region33: #{tpu_custom_call.1} parent=1 // pred_fallthru
      _
    // Predicated region
    $region34: #{tpu_custom_call.1} parent=1 // pred_check
      _
    $region35: #{tpu_custom_call.1} parent=1 // pred_check_branch
      %60 = sbr.rel (0) target = $region37
    $region36: #{tpu_custom_call.1} parent=1 // pred_region
      %62 = dma.done [#allocation6], 256
    $region37: #{tpu_custom_call.1} parent=1 // pred_fallthru
      _
    %v64 = vld [vmem:[%s0] sm:$0xff]
    %v65 = vlaneseq
    %v66 = vand.u32 %v65, 127
    %v67 = vadd.s32 %v66, 128
    %v68 = vadd.s32 %v66, 256
    %v69 = vadd.s32 %v66, 384
    %v70 = vadd.s32 %v66, 512
    %v71 = vadd.s32 %v66, 640
    %v72 = vadd.s32 %v66, 768
    %v73 = vadd.s32 %v66, 896
    %74 = vset.pattern.permute.xlu0 0
    %75 = vperm.xlu0 %74, %v64
    %v76 = vpop.permute.xlu0 %75
    %vm77 = vcmp.eq.s32.totalorder %v66, %v76
    %vm78 = vcmp.eq.s32.totalorder %v67, %v76
    %vm79 = vcmp.eq.s32.totalorder %v68, %v76
    %vm80 = vcmp.eq.s32.totalorder %v69, %v76
    %vm81 = vcmp.eq.s32.totalorder %v70, %v76
    %vm82 = vcmp.eq.s32.totalorder %v71, %v76
    %vm83 = vcmp.eq.s32.totalorder %v72, %v76
    %vm84 = vcmp.eq.s32.totalorder %v73, %v76
    %v85 = vsel %vm77, 1, 0
    %v86 = vsel %vm78, 1, 0
    %v87 = vsel %vm79, 1, 0
    %v88 = vsel %vm80, 1, 0
    %v89 = vsel %vm81, 1, 0
    %v90 = vsel %vm82, 1, 0
    %v91 = vsel %vm83, 1, 0
    %v92 = vsel %vm84, 1, 0
    %v93 = vcvt.s32.f32 %v85
    %v94 = vcvt.s32.f32 %v86
    %v95 = vcvt.s32.f32 %v87
    %v96 = vcvt.s32.f32 %v88
    %v97 = vcvt.s32.f32 %v89
    %v98 = vcvt.s32.f32 %v90
    %v99 = vcvt.s32.f32 %v91
    %v100 = vcvt.s32.f32 %v92
    %v101 = vpack.c.bf16 %v93, %v93
    %v102 = vpack.c.bf16 %v94, %v94
    %v103 = vpack.c.bf16 %v95, %v95
    %v104 = vpack.c.bf16 %v96, %v96
    %v105 = vpack.c.bf16 %v97, %v97
    %v106 = vpack.c.bf16 %v98, %v98
    %v107 = vpack.c.bf16 %v99, %v99
    %v108 = vpack.c.bf16 %v100, %v100
    %v109 = vld [vmem:[%s1] sm:$0xf]
    %v110 = vld [vmem:[%s1 + $0x4] sm:$0xf]
    %v111 = vld [vmem:[%s1 + $0x8] sm:$0xf]
    %v112 = vld [vmem:[%s1 + $0xc] sm:$0xf]
    %v113 = vld [vmem:[%s1 + $0x10] sm:$0xf]
    %v114 = vld [vmem:[%s1 + $0x14] sm:$0xf]
    %v115 = vld [vmem:[%s1 + $0x18] sm:$0xf]
    %v116 = vld [vmem:[%s1 + $0x1c] sm:$0xf]
    %v117 = vld [vmem:[%s1 + $0x20] sm:$0xf]
    %v118 = vld [vmem:[%s1 + $0x24] sm:$0xf]
    %v119 = vld [vmem:[%s1 + $0x28] sm:$0xf]
    %v120 = vld [vmem:[%s1 + $0x2c] sm:$0xf]
    %v121 = vld [vmem:[%s1 + $0x30] sm:$0xf]
    %v122 = vld [vmem:[%s1 + $0x34] sm:$0xf]
    %v123 = vld [vmem:[%s1 + $0x38] sm:$0xf]
    %v124 = vld [vmem:[%s1 + $0x3c] sm:$0xf]
    %v125 = vld [vmem:[%s1 + $0x40] sm:$0xf]
    %v126 = vld [vmem:[%s1 + $0x44] sm:$0xf]
    %v127 = vld [vmem:[%s1 + $0x48] sm:$0xf]
    %v128 = vld [vmem:[%s1 + $0x4c] sm:$0xf]
    %v129 = vld [vmem:[%s1 + $0x50] sm:$0xf]
    %v130 = vld [vmem:[%s1 + $0x54] sm:$0xf]
    %v131 = vld [vmem:[%s1 + $0x58] sm:$0xf]
    %v132 = vld [vmem:[%s1 + $0x5c] sm:$0xf]
    %v133 = vld [vmem:[%s1 + $0x60] sm:$0xf]
    %v134 = vld [vmem:[%s1 + $0x64] sm:$0xf]
    %v135 = vld [vmem:[%s1 + $0x68] sm:$0xf]
    %v136 = vld [vmem:[%s1 + $0x6c] sm:$0xf]
    %v137 = vld [vmem:[%s1 + $0x70] sm:$0xf]
    %v138 = vld [vmem:[%s1 + $0x74] sm:$0xf]
    %v139 = vld [vmem:[%s1 + $0x78] sm:$0xf]
    %v140 = vld [vmem:[%s1 + $0x7c] sm:$0xf]
    %v141 = vld [vmem:[%s1 + $0x80] sm:$0xf]
    %v142 = vld [vmem:[%s1 + $0x84] sm:$0xf]
    %v143 = vld [vmem:[%s1 + $0x88] sm:$0xf]
    %v144 = vld [vmem:[%s1 + $0x8c] sm:$0xf]
    %v145 = vld [vmem:[%s1 + $0x90] sm:$0xf]
    %v146 = vld [vmem:[%s1 + $0x94] sm:$0xf]
    %v147 = vld [vmem:[%s1 + $0x98] sm:$0xf]
    %v148 = vld [vmem:[%s1 + $0x9c] sm:$0xf]
    %v149 = vld [vmem:[%s1 + $0xa0] sm:$0xf]
    %v150 = vld [vmem:[%s1 + $0xa4] sm:$0xf]
    %v151 = vld [vmem:[%s1 + $0xa8] sm:$0xf]
    %v152 = vld [vmem:[%s1 + $0xac] sm:$0xf]
    %v153 = vld [vmem:[%s1 + $0xb0] sm:$0xf]
    %v154 = vld [vmem:[%s1 + $0xb4] sm:$0xf]
    %v155 = vld [vmem:[%s1 + $0xb8] sm:$0xf]
    %v156 = vld [vmem:[%s1 + $0xbc] sm:$0xf]
    %v157 = vld [vmem:[%s1 + $0xc0] sm:$0xf]
    %v158 = vld [vmem:[%s1 + $0xc4] sm:$0xf]
    %v159 = vld [vmem:[%s1 + $0xc8] sm:$0xf]
    %v160 = vld [vmem:[%s1 + $0xcc] sm:$0xf]
    %v161 = vld [vmem:[%s1 + $0xd0] sm:$0xf]
    %v162 = vld [vmem:[%s1 + $0xd4] sm:$0xf]
    %v163 = vld [vmem:[%s1 + $0xd8] sm:$0xf]
    %v164 = vld [vmem:[%s1 + $0xdc] sm:$0xf]
    %v165 = vld [vmem:[%s1 + $0xe0] sm:$0xf]
    %v166 = vld [vmem:[%s1 + $0xe4] sm:$0xf]
    %v167 = vld [vmem:[%s1 + $0xe8] sm:$0xf]
    %v168 = vld [vmem:[%s1 + $0xec] sm:$0xf]
    %v169 = vld [vmem:[%s1 + $0xf0] sm:$0xf]
    %v170 = vld [vmem:[%s1 + $0xf4] sm:$0xf]
    %v171 = vld [vmem:[%s1 + $0xf8] sm:$0xf]
    %v172 = vld [vmem:[%s1 + $0xfc] sm:$0xf]
    %v173 = vld [vmem:[%s1 + $0x100] sm:$0xf]
    %v174 = vld [vmem:[%s1 + $0x104] sm:$0xf]
    %v175 = vld [vmem:[%s1 + $0x108] sm:$0xf]
    %v176 = vld [vmem:[%s1 + $0x10c] sm:$0xf]
    %v177 = vld [vmem:[%s1 + $0x110] sm:$0xf]
    %v178 = vld [vmem:[%s1 + $0x114] sm:$0xf]
    %v179 = vld [vmem:[%s1 + $0x118] sm:$0xf]
    %v180 = vld [vmem:[%s1 + $0x11c] sm:$0xf]
    %v181 = vld [vmem:[%s1 + $0x120] sm:$0xf]
    %v182 = vld [vmem:[%s1 + $0x124] sm:$0xf]
    %v183 = vld [vmem:[%s1 + $0x128] sm:$0xf]
    %v184 = vld [vmem:[%s1 + $0x12c] sm:$0xf]
    %v185 = vld [vmem:[%s1 + $0x130] sm:$0xf]
    %v186 = vld [vmem:[%s1 + $0x134] sm:$0xf]
    %v187 = vld [vmem:[%s1 + $0x138] sm:$0xf]
    %v188 = vld [vmem:[%s1 + $0x13c] sm:$0xf]
    %v189 = vld [vmem:[%s1 + $0x140] sm:$0xf]
    %v190 = vld [vmem:[%s1 + $0x144] sm:$0xf]
    %v191 = vld [vmem:[%s1 + $0x148] sm:$0xf]
    %v192 = vld [vmem:[%s1 + $0x14c] sm:$0xf]
    %v193 = vld [vmem:[%s1 + $0x150] sm:$0xf]
    %v194 = vld [vmem:[%s1 + $0x154] sm:$0xf]
    %v195 = vld [vmem:[%s1 + $0x158] sm:$0xf]
    %v196 = vld [vmem:[%s1 + $0x15c] sm:$0xf]
    %v197 = vld [vmem:[%s1 + $0x160] sm:$0xf]
    %v198 = vld [vmem:[%s1 + $0x164] sm:$0xf]
    %v199 = vld [vmem:[%s1 + $0x168] sm:$0xf]
    %v200 = vld [vmem:[%s1 + $0x16c] sm:$0xf]
    %v201 = vld [vmem:[%s1 + $0x170] sm:$0xf]
    %v202 = vld [vmem:[%s1 + $0x174] sm:$0xf]
    %v203 = vld [vmem:[%s1 + $0x178] sm:$0xf]
    %v204 = vld [vmem:[%s1 + $0x17c] sm:$0xf]
    %v205 = vld [vmem:[%s1 + $0x180] sm:$0xf]
    %v206 = vld [vmem:[%s1 + $0x184] sm:$0xf]
    %v207 = vld [vmem:[%s1 + $0x188] sm:$0xf]
    %v208 = vld [vmem:[%s1 + $0x18c] sm:$0xf]
    %v209 = vld [vmem:[%s1 + $0x190] sm:$0xf]
    %v210 = vld [vmem:[%s1 + $0x194] sm:$0xf]
    %v211 = vld [vmem:[%s1 + $0x198] sm:$0xf]
    %v212 = vld [vmem:[%s1 + $0x19c] sm:$0xf]
    %v213 = vld [vmem:[%s1 + $0x1a0] sm:$0xf]
    %v214 = vld [vmem:[%s1 + $0x1a4] sm:$0xf]
    %v215 = vld [vmem:[%s1 + $0x1a8] sm:$0xf]
    %v216 = vld [vmem:[%s1 + $0x1ac] sm:$0xf]
    %v217 = vld [vmem:[%s1 + $0x1b0] sm:$0xf]
    %v218 = vld [vmem:[%s1 + $0x1b4] sm:$0xf]
    %v219 = vld [vmem:[%s1 + $0x1b8] sm:$0xf]
    %v220 = vld [vmem:[%s1 + $0x1bc] sm:$0xf]
    %v221 = vld [vmem:[%s1 + $0x1c0] sm:$0xf]
    %v222 = vld [vmem:[%s1 + $0x1c4] sm:$0xf]
    %v223 = vld [vmem:[%s1 + $0x1c8] sm:$0xf]
    %v224 = vld [vmem:[%s1 + $0x1cc] sm:$0xf]
    %v225 = vld [vmem:[%s1 + $0x1d0] sm:$0xf]
    %v226 = vld [vmem:[%s1 + $0x1d4] sm:$0xf]
    %v227 = vld [vmem:[%s1 + $0x1d8] sm:$0xf]
    %v228 = vld [vmem:[%s1 + $0x1dc] sm:$0xf]
    %v229 = vld [vmem:[%s1 + $0x1e0] sm:$0xf]
    %v230 = vld [vmem:[%s1 + $0x1e4] sm:$0xf]
    %v231 = vld [vmem:[%s1 + $0x1e8] sm:$0xf]
    %v232 = vld [vmem:[%s1 + $0x1ec] sm:$0xf]
    %v233 = vld [vmem:[%s1 + $0x1f0] sm:$0xf]
    %v359 = vunpack.c.l.b16 %v109
    %v360 = vunpack.c.l.b16 %v110
    %v361 = vunpack.c.l.b16 %v111
    %v362 = vunpack.c.l.b16 %v112
    %v363 = vunpack.c.l.b16 %v113
    %v364 = vunpack.c.l.b16 %v114
    %v365 = vunpack.c.l.b16 %v115
    %v366 = vunpack.c.l.b16 %v116
    %v367 = vunpack.c.l.b16 %v117
    %v368 = vunpack.c.l.b16 %v118
    %v369 = vunpack.c.l.b16 %v119
    %v370 = vunpack.c.l.b16 %v120
    %v371 = vunpack.c.l.b16 %v121
    %v372 = vunpack.c.l.b16 %v122
    %v373 = vunpack.c.l.b16 %v123
    %v374 = vunpack.c.l.b16 %v124
    %v375 = vunpack.c.l.b16 %v125
    %v376 = vunpack.c.l.b16 %v126
    %v377 = vunpack.c.l.b16 %v127
    %v378 = vunpack.c.l.b16 %v128
    %v379 = vunpack.c.l.b16 %v129
    %v380 = vunpack.c.l.b16 %v130
    %v381 = vunpack.c.l.b16 %v131
    %v382 = vunpack.c.l.b16 %v132
    %v383 = vunpack.c.l.b16 %v133
    %v384 = vunpack.c.l.b16 %v134
    %v385 = vunpack.c.l.b16 %v135
    %v386 = vunpack.c.l.b16 %v136
    %v387 = vunpack.c.l.b16 %v137
    %v388 = vunpack.c.l.b16 %v138
    %v389 = vunpack.c.l.b16 %v139
    %v390 = vunpack.c.l.b16 %v140
    %v391 = vunpack.c.l.b16 %v141
    %v392 = vunpack.c.l.b16 %v142
    %v393 = vunpack.c.l.b16 %v143
    %v394 = vunpack.c.l.b16 %v144
    %v395 = vunpack.c.l.b16 %v145
    %v396 = vunpack.c.l.b16 %v146
    %v397 = vunpack.c.l.b16 %v147
    %v398 = vunpack.c.l.b16 %v148
    %v399 = vunpack.c.l.b16 %v149
    %v400 = vunpack.c.l.b16 %v150
    %v401 = vunpack.c.l.b16 %v151
    %v402 = vunpack.c.l.b16 %v152
    %v403 = vunpack.c.l.b16 %v153
    %v404 = vunpack.c.l.b16 %v154
    %v405 = vunpack.c.l.b16 %v155
    %v406 = vunpack.c.l.b16 %v156
    %v407 = vunpack.c.l.b16 %v157
    %v408 = vunpack.c.l.b16 %v158
    %v409 = vunpack.c.l.b16 %v159
    %v410 = vunpack.c.l.b16 %v160
    %v411 = vunpack.c.l.b16 %v161
    %v412 = vunpack.c.l.b16 %v162
    %v413 = vunpack.c.l.b16 %v163
    %v414 = vunpack.c.l.b16 %v164
    %v415 = vunpack.c.l.b16 %v165
    %v416 = vunpack.c.l.b16 %v166
    %v417 = vunpack.c.l.b16 %v167
    %v418 = vunpack.c.l.b16 %v168
    %v419 = vunpack.c.l.b16 %v169
    %v420 = vunpack.c.l.b16 %v170
    %v421 = vunpack.c.l.b16 %v171
    %v422 = vunpack.c.l.b16 %v172
    %v423 = vunpack.c.l.b16 %v173
    %v424 = vunpack.c.l.b16 %v174
    %v425 = vunpack.c.l.b16 %v175
    %v426 = vunpack.c.l.b16 %v176
    %v427 = vunpack.c.l.b16 %v177
    %v428 = vunpack.c.l.b16 %v178
    %v429 = vunpack.c.l.b16 %v179
    %v430 = vunpack.c.l.b16 %v180
    %v431 = vunpack.c.l.b16 %v181
    %v432 = vunpack.c.l.b16 %v182
    %v433 = vunpack.c.l.b16 %v183
    %v434 = vunpack.c.l.b16 %v184
    %v435 = vunpack.c.l.b16 %v185
    %v436 = vunpack.c.l.b16 %v186
    %v437 = vunpack.c.l.b16 %v187
    %v438 = vunpack.c.l.b16 %v188
    %v439 = vunpack.c.l.b16 %v189
    %v440 = vunpack.c.l.b16 %v190
    %v441 = vunpack.c.l.b16 %v191
    %v442 = vunpack.c.l.b16 %v192
    %v443 = vunpack.c.l.b16 %v193
    %v444 = vunpack.c.l.b16 %v194
    %v445 = vunpack.c.l.b16 %v195
    %v446 = vunpack.c.l.b16 %v196
    %v447 = vunpack.c.l.b16 %v197
    %v448 = vunpack.c.l.b16 %v198
    %v449 = vunpack.c.l.b16 %v199
    %v450 = vunpack.c.l.b16 %v200
    %v451 = vunpack.c.l.b16 %v201
    %v452 = vunpack.c.l.b16 %v202
    %v453 = vunpack.c.l.b16 %v203
    %v454 = vunpack.c.l.b16 %v204
    %v455 = vunpack.c.l.b16 %v205
    %v456 = vunpack.c.l.b16 %v206
    %v457 = vunpack.c.l.b16 %v207
    %v458 = vunpack.c.l.b16 %v208
    %v459 = vunpack.c.l.b16 %v209
    %v460 = vunpack.c.l.b16 %v210
    %v461 = vunpack.c.l.b16 %v211
    %v462 = vunpack.c.l.b16 %v212
    %v463 = vunpack.c.l.b16 %v213
    %v464 = vunpack.c.l.b16 %v214
    %v465 = vunpack.c.l.b16 %v215
    %v466 = vunpack.c.l.b16 %v216
    %v467 = vunpack.c.l.b16 %v217
    %v468 = vunpack.c.l.b16 %v218
    %v469 = vunpack.c.l.b16 %v219
    %v470 = vunpack.c.l.b16 %v220
    %v471 = vunpack.c.l.b16 %v221
    %v472 = vunpack.c.l.b16 %v222
    %v473 = vunpack.c.l.b16 %v223
    %v474 = vunpack.c.l.b16 %v224
    %v475 = vunpack.c.l.b16 %v225
    %v476 = vunpack.c.l.b16 %v226
    %v477 = vunpack.c.l.b16 %v227
    %v478 = vunpack.c.l.b16 %v228
    %v479 = vunpack.c.l.b16 %v229
    %v480 = vunpack.c.l.b16 %v230
    %v481 = vunpack.c.l.b16 %v231
    %v482 = vunpack.c.l.b16 %v232
    %v483 = vunpack.c.l.b16 %v233
    %v484 = vpack.c.b16 %v360, %v359
    %v485 = vpack.c.b16 %v362, %v361
    %v486 = vpack.c.b16 %v364, %v363
    %v487 = vpack.c.b16 %v366, %v365
    %v488 = vpack.c.b16 %v368, %v367
    %v489 = vpack.c.b16 %v370, %v369
    %v490 = vpack.c.b16 %v372, %v371
    %v491 = vpack.c.b16 %v374, %v373
    %v492 = vpack.c.b16 %v376, %v375
    %v493 = vpack.c.b16 %v378, %v377
    %v494 = vpack.c.b16 %v380, %v379
    %v495 = vpack.c.b16 %v382, %v381
    %v496 = vpack.c.b16 %v384, %v383
    %v497 = vpack.c.b16 %v386, %v385
    %v498 = vpack.c.b16 %v388, %v387
    %v499 = vpack.c.b16 %v390, %v389
    %v500 = vpack.c.b16 %v392, %v391
    %v501 = vpack.c.b16 %v394, %v393
    %v502 = vpack.c.b16 %v396, %v395
    %v503 = vpack.c.b16 %v398, %v397
    %v504 = vpack.c.b16 %v400, %v399
    %v505 = vpack.c.b16 %v402, %v401
    %v506 = vpack.c.b16 %v404, %v403
    %v507 = vpack.c.b16 %v406, %v405
    %v508 = vpack.c.b16 %v408, %v407
    %v509 = vpack.c.b16 %v410, %v409
    %v510 = vpack.c.b16 %v412, %v411
    %v511 = vpack.c.b16 %v414, %v413
    %v512 = vpack.c.b16 %v416, %v415
    %v513 = vpack.c.b16 %v418, %v417
    %v514 = vpack.c.b16 %v420, %v419
    %v515 = vpack.c.b16 %v422, %v421
    %v516 = vpack.c.b16 %v424, %v423
    %v517 = vpack.c.b16 %v426, %v425
    %v518 = vpack.c.b16 %v428, %v427
    %v519 = vpack.c.b16 %v430, %v429
    %v520 = vpack.c.b16 %v432, %v431
    %v521 = vpack.c.b16 %v434, %v433
    %v522 = vpack.c.b16 %v436, %v435
    %v523 = vpack.c.b16 %v438, %v437
    %v524 = vpack.c.b16 %v440, %v439
    %v525 = vpack.c.b16 %v442, %v441
    %v526 = vpack.c.b16 %v444, %v443
    %v527 = vpack.c.b16 %v446, %v445
    %v528 = vpack.c.b16 %v448, %v447
    %v529 = vpack.c.b16 %v450, %v449
    %v530 = vpack.c.b16 %v452, %v451
    %v531 = vpack.c.b16 %v454, %v453
    %v532 = vpack.c.b16 %v456, %v455
    %v533 = vpack.c.b16 %v458, %v457
    %v534 = vpack.c.b16 %v460, %v459
    %v535 = vpack.c.b16 %v462, %v461
    %v536 = vpack.c.b16 %v464, %v463
    %v537 = vpack.c.b16 %v466, %v465
    %v538 = vpack.c.b16 %v468, %v467
    %v539 = vpack.c.b16 %v470, %v469
    %v540 = vpack.c.b16 %v472, %v471
    %v541 = vpack.c.b16 %v474, %v473
    %v542 = vpack.c.b16 %v476, %v475
    %v543 = vpack.c.b16 %v478, %v477
    %v544 = vpack.c.b16 %v480, %v479
    %v545 = vpack.c.b16 %v482, %v481
    %v546 = vpack.c.b16 %v483, %v483
    %vm609 = vcmask 850944
    %v611 = vsel %vm609, %v108, 0
    %vm613 = vcmask 1043456
    %v615 = vsel %vm613, %v546, 0
    %617 = vmatpush.bf16.msra.mxu0 %v491
    %618 = vmatpush.bf16.msra.mxu0 %v490
    %619 = vmatpush.bf16.msra.mxu0 %v489
    %620 = vmatpush.bf16.msra.mxu0 %v488
    %621 = vmatpush.bf16.msra.mxu0 %v487
    %622 = vmatpush.bf16.msra.mxu0 %v486
    %623 = vmatpush.bf16.msra.mxu0 %v485
    %624 = vmatpush.bf16.msra.mxu0 %v484
    %625 = vmatmul.bf16.gmra.mxu0 %v101
    %v626 = vpop.f32.mrf.mxu0
    %v627 = vadd.f32 0.0, %v626
    %v628 = vpop.f32.mrf.mxu0
    %629 = vdwg.mxu0
    %630 = vmatpush.bf16.msra.mxu0 %v499
    %631 = vmatpush.bf16.msra.mxu0 %v498
    %632 = vmatpush.bf16.msra.mxu0 %v497
    %633 = vmatpush.bf16.msra.mxu0 %v496
    %634 = vmatpush.bf16.msra.mxu0 %v495
    %635 = vmatpush.bf16.msra.mxu0 %v494
    %636 = vmatpush.bf16.msra.mxu0 %v493
    %637 = vmatpush.bf16.msra.mxu0 %v492
    %638 = vmatmul.bf16.gmra.mxu0 %v102
    %v639 = vpop.f32.mrf.mxu0
    %v640 = vadd.f32 %v627, %v639
    %v641 = vpop.f32.mrf.mxu0
    %642 = vdwg.mxu0
    %643 = vmatpush.bf16.msra.mxu0 %v507
    %644 = vmatpush.bf16.msra.mxu0 %v506
    %645 = vmatpush.bf16.msra.mxu0 %v505
    %646 = vmatpush.bf16.msra.mxu0 %v504
    %647 = vmatpush.bf16.msra.mxu0 %v503
    %648 = vmatpush.bf16.msra.mxu0 %v502
    %649 = vmatpush.bf16.msra.mxu0 %v501
    %650 = vmatpush.bf16.msra.mxu0 %v500
    %651 = vmatmul.bf16.gmra.mxu0 %v103
    %v652 = vpop.f32.mrf.mxu0
    %v653 = vadd.f32 %v640, %v652
    %v654 = vpop.f32.mrf.mxu0
    %655 = vdwg.mxu0
    %656 = vmatpush.bf16.msra.mxu0 %v515
    %657 = vmatpush.bf16.msra.mxu0 %v514
    %658 = vmatpush.bf16.msra.mxu0 %v513
    %659 = vmatpush.bf16.msra.mxu0 %v512
    %660 = vmatpush.bf16.msra.mxu0 %v511
    %661 = vmatpush.bf16.msra.mxu0 %v510
    %662 = vmatpush.bf16.msra.mxu0 %v509
    %663 = vmatpush.bf16.msra.mxu0 %v508
    %664 = vmatmul.bf16.gmra.mxu0 %v104
    %v665 = vpop.f32.mrf.mxu0
    %v666 = vadd.f32 %v653, %v665
    %v667 = vpop.f32.mrf.mxu0
    %668 = vdwg.mxu0
    %669 = vmatpush.bf16.msra.mxu0 %v523
    %670 = vmatpush.bf16.msra.mxu0 %v522
    %671 = vmatpush.bf16.msra.mxu0 %v521
    %672 = vmatpush.bf16.msra.mxu0 %v520
    %673 = vmatpush.bf16.msra.mxu0 %v519
    %674 = vmatpush.bf16.msra.mxu0 %v518
    %675 = vmatpush.bf16.msra.mxu0 %v517
    %676 = vmatpush.bf16.msra.mxu0 %v516
    %677 = vmatmul.bf16.gmra.mxu0 %v105
    %v678 = vpop.f32.mrf.mxu0
    %v679 = vadd.f32 %v666, %v678
    %v680 = vpop.f32.mrf.mxu0
    %681 = vdwg.mxu0
    %682 = vmatpush.bf16.msra.mxu0 %v531
    %683 = vmatpush.bf16.msra.mxu0 %v530
    %684 = vmatpush.bf16.msra.mxu0 %v529
    %685 = vmatpush.bf16.msra.mxu0 %v528
    %686 = vmatpush.bf16.msra.mxu0 %v527
    %687 = vmatpush.bf16.msra.mxu0 %v526
    %688 = vmatpush.bf16.msra.mxu0 %v525
    %689 = vmatpush.bf16.msra.mxu0 %v524
    %690 = vmatmul.bf16.gmra.mxu0 %v106
    %v691 = vpop.f32.mrf.mxu0
    %v692 = vadd.f32 %v679, %v691
    %v693 = vpop.f32.mrf.mxu0
    %694 = vdwg.mxu0
    %695 = vmatpush.bf16.msra.mxu0 %v539
    %696 = vmatpush.bf16.msra.mxu0 %v538
    %697 = vmatpush.bf16.msra.mxu0 %v537
    %698 = vmatpush.bf16.msra.mxu0 %v536
    %699 = vmatpush.bf16.msra.mxu0 %v535
    %700 = vmatpush.bf16.msra.mxu0 %v534
    %701 = vmatpush.bf16.msra.mxu0 %v533
    %702 = vmatpush.bf16.msra.mxu0 %v532
    %703 = vmatmul.bf16.gmra.mxu0 %v107
    %v704 = vpop.f32.mrf.mxu0
    %v705 = vadd.f32 %v692, %v704
    %v706 = vpop.f32.mrf.mxu0
    %707 = vdwg.mxu0
    %708 = vmatpush.bf16.msra.mxu0 0
    %709 = vmatpush.bf16.msra.mxu0 %v615
    %710 = vmatpush.bf16.msra.mxu0 %v545
    %711 = vmatpush.bf16.msra.mxu0 %v544
    %712 = vmatpush.bf16.msra.mxu0 %v543
    %713 = vmatpush.bf16.msra.mxu0 %v542
    %714 = vmatpush.bf16.msra.mxu0 %v541
    %715 = vmatpush.bf16.msra.mxu0 %v540
    %716 = vmatmul.bf16.gmra.mxu0 %v611
    %v717 = vpop.f32.mrf.mxu0
    %v718 = vadd.f32 %v705, %v717
    %v719 = vpop.f32.mrf.mxu0
    %720 = vdwg.mxu0
    %v721 = vpack.c.bf16 %v718, %v718
    %v722 = vld [vmem:[#allocation2] sm:$0xff]
    %v723 = vpack.c.bf16 %v722, %v722
    %v724 = vld [vmem:[%s2] sm:$0xf]
    %v725 = vld [vmem:[%s2 + $0x4] sm:$0xf]
    %v726 = vld [vmem:[%s2 + $0x8] sm:$0xf]
    %v727 = vld [vmem:[%s2 + $0xc] sm:$0xf]
    %v728 = vld [vmem:[%s3] sm:$0xf]
    %v729 = vld [vmem:[%s3 + $0x4] sm:$0xf]
    %v730 = vld [vmem:[%s3 + $0x8] sm:$0xf]
    %v731 = vld [vmem:[%s3 + $0xc] sm:$0xf]
    %v736 = vunpack.c.l.b16 %v728
    %v737 = vunpack.c.l.b16 %v729
    %v738 = vunpack.c.l.b16 %v730
    %v739 = vunpack.c.l.b16 %v731
    %v740 = vpack.c.b16 %v737, %v736
    %v741 = vpack.c.b16 %v739, %v738
    %vm744 = vcmask 261120
    %v746 = vsel %vm744, %v723, 0
    %748 = vmatpush.bf16.msra.mxu0 0
    %749 = vmatpush.bf16.msra.mxu0 0
    %750 = vmatpush.bf16.msra.mxu0 0
    %751 = vmatpush.bf16.msra.mxu0 0
    %752 = vmatpush.bf16.msra.mxu0 0
    %753 = vmatpush.bf16.msra.mxu0 0
    %754 = vmatpush.bf16.msra.mxu0 %v741
    %755 = vmatpush.bf16.msra.mxu0 %v740
    %756 = vmatmul.bf16.gmra.mxu0 %v746
    %v757 = vpop.f32.mrf.mxu0
    %v758 = vadd.f32 0.0, %v757
    %v759 = vpop.f32.mrf.mxu0
    %760 = vdwg.mxu0
    %v765 = vunpack.c.l.b16 %v724
    %v766 = vunpack.c.l.b16 %v725
    %v767 = vunpack.c.l.b16 %v726
    %v768 = vunpack.c.l.b16 %v727
    %v769 = vpack.c.b16 %v766, %v765
    %v770 = vpack.c.b16 %v768, %v767
    %v774 = vsel %vm744, %v721, 0
    %776 = vmatpush.bf16.msra.mxu0 0
    %777 = vmatpush.bf16.msra.mxu0 0
    %778 = vmatpush.bf16.msra.mxu0 0
    %779 = vmatpush.bf16.msra.mxu0 0
    %780 = vmatpush.bf16.msra.mxu0 0
    %781 = vmatpush.bf16.msra.mxu0 0
    %782 = vmatpush.bf16.msra.mxu0 %v770
    %783 = vmatpush.bf16.msra.mxu0 %v769
    %784 = vmatmul.bf16.gmra.mxu0 %v774
    %v785 = vpop.f32.mrf.mxu0
    %v786 = vadd.f32 %v758, %v785
    %v787 = vpop.f32.mrf.mxu0
    %788 = vdwg.mxu0
    %v789 = vld [vmem:[%s4] sm:$0x1]
    %v791 = vperm.slane %v789, 0
    %v793 = vadd.f32 %v786, %v791
    %v794 = vxor.u32 %v793, 2147483648
    %v795 = vmul.f32 %v794, 1.442695
    %v796 = vpow.pop %v795
    %v797 = vadd.f32 %v796, 1.0
    %v798 = vrcp.pop %v797
    %v799 = vmul.f32 %v797, %v798
    %v800 = vsub.f32 1.0, %v799
    %v801 = vmul.f32 %v798, %v800
    %v802 = vadd.f32 %v798, %v801
    %vm803 = vweird.f32 %v797
    %vm804 = vweird.f32 %v798
    %vm805 = vmor %vm803, %vm804
    %v806 = vsel %vm805, %v798, %v802
    %v807 = vand.u32 2147483647, %v797
    %vm808 = vcmp.eq.f32.partialorder %v807, 8.507059e+37
    %v809 = vand.u32 %v797, 2147483648
    %v810 = vor.u32 1.1754944e-38, %v809
    %v811 = vsel %vm808, %v810, %v806
    %v812 = vmul.f32 1.0, %v811
    %v813 = vtanh.pop %v793
    %v814 = vld [vmem:[#allocation5] sm:$0xff]
    %816 = vrot.lane.b32.xlu0 %v814, 32
    %v817 = vpop.permute.xlu0 %816
    %v819 = vmul.f32 %v812, %v817
    %821 = vrot.lane.b32.xlu0 %v813, 64
    %v822 = vpop.permute.xlu0 %821
    %v824 = vmul.f32 %v812, %v822
    %826 = vrot.lane.b32.xlu0 %v824, 32
    %v827 = vpop.permute.xlu0 %826
    %v829 = vadd.f32 %v819, %v827
    %v830 = vtanh.pop %v829
    %832 = vrot.lane.b32.xlu0 %v830, 64
    %v833 = vpop.permute.xlu0 %832
    %v835 = vmul.f32 %v812, %v833
    %837 = vrot.lane.b32.xlu0 %v835, 32
    %v838 = vpop.permute.xlu0 %837
    %840 = vst.msk [vmem:[#allocation8] sm:$0xff] %vm744, %v838
    %842 = vrot.lane.b32.xlu0 %v829, 96
    %v843 = vpop.permute.xlu0 %842
    %845 = vst.msk [vmem:[#allocation10] sm:$0xff] %vm744, %v843
    %v846 = vpack.c.bf16 %v835, %v835
    %s847 = scalar_lea.vmem [#allocation2], 8
    %v848 = vld [vmem:[%s847] sm:$0xff]
    %v849 = vpack.c.bf16 %v848, %v848
    %s850 = scalar_lea.vmem %s2, 16
    %v851 = vld [vmem:[%s850] sm:$0xf]
    %v852 = vld [vmem:[%s850 + $0x4] sm:$0xf]
    %v853 = vld [vmem:[%s850 + $0x8] sm:$0xf]
    %v854 = vld [vmem:[%s850 + $0xc] sm:$0xf]
    %s855 = scalar_lea.vmem %s3, 16
    %v856 = vld [vmem:[%s855] sm:$0xf]
    %v857 = vld [vmem:[%s855 + $0x4] sm:$0xf]
    %v858 = vld [vmem:[%s855 + $0x8] sm:$0xf]
    %v859 = vld [vmem:[%s855 + $0xc] sm:$0xf]
    %v864 = vunpack.c.l.b16 %v856
    %v865 = vunpack.c.l.b16 %v857
    %v866 = vunpack.c.l.b16 %v858
    %v867 = vunpack.c.l.b16 %v859
    %v868 = vpack.c.b16 %v865, %v864
    %v869 = vpack.c.b16 %v867, %v866
    %v873 = vsel %vm744, %v849, 0
    %875 = vmatpush.bf16.msra.mxu0 0
    %876 = vmatpush.bf16.msra.mxu0 0
    %877 = vmatpush.bf16.msra.mxu0 0
    %878 = vmatpush.bf16.msra.mxu0 0
    %879 = vmatpush.bf16.msra.mxu0 0
    %880 = vmatpush.bf16.msra.mxu0 0
    %881 = vmatpush.bf16.msra.mxu0 %v869
    %882 = vmatpush.bf16.msra.mxu0 %v868
    %883 = vmatmul.bf16.gmra.mxu0 %v873
    %v884 = vpop.f32.mrf.mxu0
    %v885 = vadd.f32 0.0, %v884
    %v886 = vpop.f32.mrf.mxu0
    %887 = vdwg.mxu0
    %889 = vrot.lane.b32.xlu0 %v846, 32
    %v890 = vpop.permute.xlu0 %889
    %v895 = vunpack.c.l.b16 %v851
    %v896 = vunpack.c.l.b16 %v852
    %v897 = vunpack.c.l.b16 %v853
    %v898 = vunpack.c.l.b16 %v854
    %v899 = vpack.c.b16 %v896, %v895
    %v900 = vpack.c.b16 %v898, %v897
    %v904 = vsel %vm744, %v890, 0
    %906 = vmatpush.bf16.msra.mxu0 0
    %907 = vmatpush.bf16.msra.mxu0 0
    %908 = vmatpush.bf16.msra.mxu0 0
    %909 = vmatpush.bf16.msra.mxu0 0
    %910 = vmatpush.bf16.msra.mxu0 0
    %911 = vmatpush.bf16.msra.mxu0 0
    %912 = vmatpush.bf16.msra.mxu0 %v900
    %913 = vmatpush.bf16.msra.mxu0 %v899
    %914 = vmatmul.bf16.gmra.mxu0 %v904
    %v915 = vpop.f32.mrf.mxu0
    %v916 = vadd.f32 %v885, %v915
    %v917 = vpop.f32.mrf.mxu0
    %918 = vdwg.mxu0
    %s919 = scalar_lea.vmem %s4, 1
    %v920 = vld [vmem:[%s919] sm:$0x1]
    %v922 = vperm.slane %v920, 0
    %v924 = vadd.f32 %v916, %v922
    %v925 = vxor.u32 %v924, 2147483648
    %v926 = vmul.f32 %v925, 1.442695
    %v927 = vpow.pop %v926
    %v928 = vadd.f32 %v927, 1.0
    %v929 = vrcp.pop %v928
    %v930 = vmul.f32 %v928, %v929
    %v931 = vsub.f32 1.0, %v930
    %v932 = vmul.f32 %v929, %v931
    %v933 = vadd.f32 %v929, %v932
    %vm934 = vweird.f32 %v928
    %vm935 = vweird.f32 %v929
    %vm936 = vmor %vm934, %vm935
    %v937 = vsel %vm936, %v929, %v933
    %v938 = vand.u32 2147483647, %v928
    %vm939 = vcmp.eq.f32.partialorder %v938, 8.507059e+37
    %v940 = vand.u32 %v928, 2147483648
    %v941 = vor.u32 1.1754944e-38, %v940
    %v942 = vsel %vm939, %v941, %v937
    %v943 = vmul.f32 1.0, %v942
    %v944 = vtanh.pop %v924
    %s945 = scalar_lea.vmem [#allocation5], 8
    %v946 = vld [vmem:[%s945] sm:$0xff]
    %948 = vrot.lane.b32.xlu0 %v946, 32
    %v949 = vpop.permute.xlu0 %948
    %v951 = vmul.f32 %v943, %v949
    %953 = vrot.lane.b32.xlu0 %v944, 64
    %v954 = vpop.permute.xlu0 %953
    %v956 = vmul.f32 %v943, %v954
    %958 = vrot.lane.b32.xlu0 %v956, 32
    %v959 = vpop.permute.xlu0 %958
    %v961 = vadd.f32 %v951, %v959
    %v962 = vtanh.pop %v961
    %964 = vrot.lane.b32.xlu0 %v962, 64
    %v965 = vpop.permute.xlu0 %964
    %v967 = vmul.f32 %v943, %v965
    %969 = vrot.lane.b32.xlu0 %v967, 32
    %v970 = vpop.permute.xlu0 %969
    %s972 = scalar_lea.vmem [#allocation8], 8
    %973 = vst.msk [vmem:[%s972] sm:$0xff] %vm744, %v970
    %975 = vrot.lane.b32.xlu0 %v961, 96
    %v976 = vpop.permute.xlu0 %975
    %s978 = scalar_lea.vmem [#allocation10], 8
    %979 = vst.msk [vmem:[%s978] sm:$0xff] %vm744, %v976
    %v980 = vpack.c.bf16 %v967, %v967
    %982 = vrot.lane.b32.xlu0 %v980, 32
    %v983 = vpop.permute.xlu0 %982
    %vm985 = vcmask 257024
    %986 = vst.msk [vmem:[#allocation7] sm:$0xf] %vm985, %v983
    // Predicated region
    $region38: #{tpu_custom_call.1} parent=1 // pred_check
      _
    $region39: #{tpu_custom_call.1} parent=1 // pred_check_branch
      %988 = sbr.rel (0) target = $region41
    $region40: #{tpu_custom_call.1} parent=1 // pred_region
      %990 = vsyncadd [#allocation4], 0
      %s992 = sshll.u32 [#allocation7], 4
      %s993 = int_to_ptr.vmem [resolvable:$true] %s992
      %s994 = sshll.u32 %s7, 4
      %s995 = int_to_ptr.hbm [resolvable:$true] %s994
      %997 = dma.vmem_to_hbm [thread:$0]  %s993, 64, %s995, [#allocation4]
    $region41: #{tpu_custom_call.1} parent=1 // pred_fallthru
      _
    // Predicated region
    $region42: #{tpu_custom_call.1} parent=1 // pred_check
      _
    $region43: #{tpu_custom_call.1} parent=1 // pred_check_branch
      %999 = sbr.rel (0) target = $region45
    $region44: #{tpu_custom_call.1} parent=1 // pred_region
      %1001 = vsyncadd [#allocation9], 0
      %s1002 = sshll.u32 [#allocation8], 4
      %s1003 = int_to_ptr.vmem [resolvable:$true] %s1002
      %s1004 = sshll.u32 %s8, 4
      %s1005 = int_to_ptr.hbm [resolvable:$true] %s1004
      %1010 = dma.vmem_to_hbm [thread:$0]  %s1003, 256, %s1005, [#allocation9], 128, 128, 8
    $region45: #{tpu_custom_call.1} parent=1 // pred_fallthru
      _
    // Predicated region
    $region46: #{tpu_custom_call.1} parent=1 // pred_check
      _
    $region47: #{tpu_custom_call.1} parent=1 // pred_check_branch
      %1012 = sbr.rel (0) target = $region49
    $region48: #{tpu_custom_call.1} parent=1 // pred_region
      %1014 = vsyncadd [#allocation9], 0
      %s1015 = sshll.u32 [#allocation10], 4
      %s1016 = int_to_ptr.vmem [resolvable:$true] %s1015
      %s1017 = sshll.u32 %s9, 4
      %s1018 = int_to_ptr.hbm [resolvable:$true] %s1017
      %1023 = dma.vmem_to_hbm [thread:$0]  %s1016, 256, %s1018, [#allocation9], 128, 128, 8
    $region49: #{tpu_custom_call.1} parent=1 // pred_fallthru
      _
    // Predicated region
    $region50: #{tpu_custom_call.1} parent=1 // pred_check
      _
    $region51: #{tpu_custom_call.1} parent=1 // pred_check_branch
      %1025 = sbr.rel (0) target = $region53
    $region52: #{tpu_custom_call.1} parent=1 // pred_region
      %1027 = dma.done [#allocation4], 64
    $region53: #{tpu_custom_call.1} parent=1 // pred_fallthru
      _
    // Predicated region
    $region54: #{tpu_custom_call.1} parent=1 // pred_check
      _
    $region55: #{tpu_custom_call.1} parent=1 // pred_check_branch
      %1029 = sbr.rel (0) target = $region57
    $region56: #{tpu_custom_call.1} parent=1 // pred_region
      %1031 = dma.done [#allocation9], 256
    $region57: #{tpu_custom_call.1} parent=1 // pred_fallthru
      _
    // Predicated region
    $region58: #{tpu_custom_call.1} parent=1 // pred_check
      _
    $region59: #{tpu_custom_call.1} parent=1 // pred_check_branch
      %1033 = sbr.rel (0) target = $region61
    $region60: #{tpu_custom_call.1} parent=1 // pred_region
      %1035 = dma.done [#allocation9], 256
    $region61: #{tpu_custom_call.1} parent=1 // pred_fallthru
      _
    %1036 = vsyncpa [#allocation3], 1
    %1037 = vsyncpa [#allocation6], 1
    %1038 = vsyncpa [#allocation4], 1
    %1039 = vsyncpa [#allocation9], 1

</llo_original>
